<compile_context>
chip_gen: v7x
topology: tpu7x:2x2x1
jax: 0.10.0
libtpu: 0.0.40
codegen_flags: <defaults>
</compile_context>

<pallas_src>
import jax
import jax.numpy as jnp
from jax.experimental import pallas as pl
from jax.experimental.pallas import tpu as pltpu


def softmax_unfused_kernel(x_ref, o_ref):
    # x_ref / o_ref block: (1, Cb, H, W). Reduction over axis=2 (H).
    x = x_ref[...].astype(jnp.float32)
    e = jnp.exp(x)                                  # EUP transcendental
    s = jnp.sum(e, axis=2, keepdims=True)           # (1, Cb, 1, W)
    inv = pl.reciprocal(s, approx=False)            # exact: keeps 1e-5 tolerance
    o_ref[...] = (e * inv).astype(o_ref.dtype)      # broadcast multiply over H


def softmax_unfused(x, *, c_block=None, vmem_limit_bytes=64 * 1024 * 1024):
    N, C, H, W = x.shape

    if c_block is None:
        # Target ~2 MiB per f32 input block: c_block * H * W * 4 bytes.
        # With double-buffered in + out blocks this stays well inside the
        # 16 MiB (v5e) / 32 MiB (v6e, v7x) default scoped VMEM budgets.
        budget_elems = (2 * 1024 * 1024) // 4
        c_block = max(1, min(C, budget_elems // max(1, H * W)))

    grid = (N, pl.cdiv(C, c_block))

    return pl.pallas_call(
        softmax_unfused_kernel,
        out_shape=jax.ShapeDtypeStruct((N, C, H, W), x.dtype),
        grid_spec=pltpu.PrefetchScalarGridSpec(
            num_scalar_prefetch=0,
            grid=grid,
            in_specs=[
                pl.BlockSpec((1, c_block, H, W), lambda n, c: (n, c, 0, 0)),
            ],
            out_specs=pl.BlockSpec((1, c_block, H, W), lambda n, c: (n, c, 0, 0)),
        ),
        compiler_params=pltpu.CompilerParams(
            # Both axes are independent (reduction is fully inside a block),
            # so mark both parallel — lets v7x megacore shard the grid.
            dimension_semantics=("parallel", "parallel"),
            vmem_limit_bytes=vmem_limit_bytes,
        ),
    )(x)


def softmax_unfused_ref(x):
    # Pure-JAX reference matching the PyTorch module exactly.
    e = jnp.exp(x.astype(jnp.float32))
    return (e / jnp.sum(e, axis=2, keepdims=True)).astype(x.dtype)


if __name__ == "__main__":
    key = jax.random.PRNGKey(0)
    # Small NCHW shape consistent with the module's 4-D input (module used
    # (1, 2, 3, 4)); softmax runs over dim=2.
    x = jax.random.normal(key, (2, 4, 16, 16), dtype=jnp.float32)

    out = softmax_unfused(x)
    out = jax.block_until_ready(out)

    ref = softmax_unfused_ref(x)
    assert out.shape == x.shape, f"shape mismatch: {out.shape} vs {x.shape}"
    assert jnp.allclose(out, ref, atol=1e-5, rtol=1e-5), "mismatch vs reference"

    print("KERNEL_OK")
</pallas_src>

<mosaic_0001>
module attributes {stable_mosaic.version = 11 : i64} {
  func.func @softmax_unfused_kernel(%arg0: i32, %arg1: i32, %arg2: memref<1x4x16x16xf32, #tpu.memory_space<vmem>>, %arg3: memref<1x4x16x16xf32, #tpu.memory_space<vmem>>) attributes {dimension_semantics = [#tpu.dimension_semantics<parallel>, #tpu.dimension_semantics<parallel>], iteration_bounds = array<i64: 2, 1>, scalar_prefetch = 0 : i64, scratch_operands = 0 : i64, tpu.core_type = #tpu.core_type<tc>, window_params = [{transform_indices = @transform_0, window_bounds = array<i64: 1, 4, 16, 16>}, {transform_indices = @transform_1, window_bounds = array<i64: 1, 4, 16, 16>}]} {
    %c0 = arith.constant 0 : index
    %c0_0 = arith.constant 0 : index
    %c0_1 = arith.constant 0 : index
    %c0_2 = arith.constant 0 : index
    %0 = vector.load %arg2[%c0, %c0_0, %c0_1, %c0_2] : memref<1x4x16x16xf32, #tpu.memory_space<vmem>>, vector<1x4x16x16xf32>
    %1 = math.exp %0 : vector<1x4x16x16xf32>
    %cst = arith.constant dense<0.000000e+00> : vector<1x4x16xf32>
    %2 = vector.multi_reduction <add>, %1, %cst [2] : vector<1x4x16x16xf32> to vector<1x4x16xf32>
    %3 = vector.shape_cast %2 : vector<1x4x16xf32> to vector<1x4x1x16xf32>
    %4 = tpu.reciprocal %3 : vector<1x4x1x16xf32> -> vector<1x4x1x16xf32>
    %5 = vector.broadcast %4 : vector<1x4x1x16xf32> to vector<1x4x16x16xf32>
    %6 = arith.mulf %1, %5 : vector<1x4x16x16xf32>
    %c0_3 = arith.constant 0 : index
    %c0_4 = arith.constant 0 : index
    %c0_5 = arith.constant 0 : index
    %c0_6 = arith.constant 0 : index
    %7 = vector.load %arg3[%c0_3, %c0_4, %c0_5, %c0_6] : memref<1x4x16x16xf32, #tpu.memory_space<vmem>>, vector<1x4x16x16xf32>
    tpu.vector_store %arg3[%c0_3, %c0_4, %c0_5, %c0_6], %6 {strides = array<i32>} : memref<1x4x16x16xf32, #tpu.memory_space<vmem>>, vector<1x4x16x16xf32>,
    return
  }
  func.func @transform_0(%arg0: i32, %arg1: i32) -> (i32, i32, i32, i32) {
    %c0_i32 = arith.constant 0 : i32
    %c0_i32_0 = arith.constant 0 : i32
    %c0_i32_1 = arith.constant 0 : i32
    return %arg0, %arg1, %c0_i32, %c0_i32_0 : i32, i32, i32, i32
  }
  func.func @transform_1(%arg0: i32, %arg1: i32) -> (i32, i32, i32, i32) {
    %c0_i32 = arith.constant 0 : i32
    %c0_i32_0 = arith.constant 0 : i32
    %c0_i32_1 = arith.constant 0 : i32
    return %arg0, %arg1, %c0_i32, %c0_i32_0 : i32, i32, i32, i32
  }
}

</mosaic_0001>

<llo_original>
// kernel: tpu_custom_call.1
$region0: #{tpu_custom_call.1}
  #allocation0 [shape = 'u32[]', space=smem, size = 0x4, offset = 0x4, fixed_abs, tag = 'smem constant byte address 0x4 - core index']
  #allocation1 [shape = 'u32[144,128]{1,0:T(1,128)}', space=vmem, size = 0x12000, scoped, tag = 'internal scratch']
  %s0 = inlined_call_operand.hbm [shape: f32[2,4,16,16], index: 0, kind: input, shape index: {}]
  %s1 = inlined_call_operand.hbm [shape: f32[2,4,16,16], index: 1, kind: output, shape index: {}]
  %s2 = sld [smem:[#allocation0]]
  $region41: #{tpu_custom_call.1} parent=0
    _
  %s4 = ssub.s32 1, %s2
  %s5 = scalar_select 0, %s4, %s2
  $region1: #{tpu_custom_call.1} parent=0
    #allocation2 [shape = 'u8[65536]{0}', space=vmem, size = 0x10000, scoped, tag = 'input window, operand 0']
    #allocation3 [shape = 's32[2]{0}', space=sflag, size = 0x8, scoped, tag = 'scoped memory for tpu_custom_call.1']
    #allocation4 [shape = 's32[2]{0}', space=sflag, size = 0x8, scoped, tag = 'scoped memory for tpu_custom_call.1']
    #allocation5 [shape = 'u8[65536]{0}', space=vmem, size = 0x10000, scoped, tag = 'output window, operand 0']
    %6 = vsyncpa [#allocation3], 0
    %s7 = scalar_lea.sflag [#allocation3], 1
    %8 = vsyncpa %s7, 0
    %9 = vsyncpa [#allocation4], 0
    %s10 = scalar_lea.sflag [#allocation4], 1
    %11 = vsyncpa %s10, 0
    loop: start=0, step=1, limit=4
    $region2: #{tpu_custom_call.1} parent=1 // loop_pre_header
      _
    $region3: #{tpu_custom_call.1} parent=1 // loop_header
      %s13 = sphi 0, %s17
      %p14 = scmp.ge.s32.totalorder %s13, 4
      %s20 = sphi 0, %s32
      %s21 = sphi 0, %s28
      %s22 = sphi 0, %s20
      %s23 = sphi 0, %s21
      %s24 = sphi 0, %s22
      %s25 = sphi 0, %s23
      %s37 = sphi 0, %s39
      %s40 = sphi 0, %s37
      %s41 = sphi 0, %s40
      %s57 = sphi 0, %s41
      %s65 = sphi 0, %s67
      %s68 = sphi 0, %s65
      %s69 = sphi 0, %s68
      %s85 = sphi 0, %s69
    $region4: #{tpu_custom_call.1} parent=1 // loop_header_branch
      %16 = sbr.rel (%p14) target = $region8
    $region5: #{tpu_custom_call.1} parent=1 // loop_body
      %s18 = ssub.s32 %s13, 1
      %s19 = ssub.s32 %s13, 2
      %s26 = sadd.s32 1, %s21
      %p27 = scmp.ge.s32.totalorder %s26, 1
      %s28 = scalar_select %p27, 0, %s26
      %s29 = sadd.s32 1, %s20
      %s30 = scalar_select %p27, %s29, %s20
      %p31 = scmp.ge.s32.totalorder %s30, 2
      %s32 = scalar_select %p31, 0, %s30
      %s33 = ssub.s32 %s20, %s32
      %s34 = ssub.s32 %s21, %s28
      %s35 = sor.u32 %s33, %s34
      %p36 = scmp.eq.s32.totalorder %s35, 0
      %s38 = sadd.s32 %s37, 1
      %s39 = scalar_select %p36, %s37, %s38
      %p42 = pneg %p36
      %p43 = scmp.eq.s32.totalorder %s13, 1
      %p44 = por %p42, %p43
      %p45 = scmp.ne.s32.totalorder %s37, %s40
      %p46 = scmp.eq.s32.totalorder %s13, 0
      %p47 = por %p45, %p46
      %p48 = scmp.ne.s32.totalorder %s37, %s40
      %p49 = scmp.eq.s32.totalorder %s18, 1
      %p50 = por %p48, %p49
      %p51 = scmp.ne.s32.totalorder %s40, %s41
      %p52 = scmp.eq.s32.totalorder %s18, 0
      %p53 = por %p51, %p52
      %p54 = scmp.ne.s32.totalorder %s40, %s41
      %p55 = scmp.eq.s32.totalorder %s19, 1
      %p56 = por %p54, %p55
      %p58 = scmp.ne.s32.totalorder %s41, %s57
      %p59 = scmp.eq.s32.totalorder %s19, 0
      %p60 = por %p58, %p59
      %s61 = ssub.s32 %s20, %s32
      %s62 = ssub.s32 %s21, %s28
      %s63 = sor.u32 %s61, %s62
      %p64 = scmp.eq.s32.totalorder %s63, 0
      %s66 = sadd.s32 %s65, 1
      %s67 = scalar_select %p64, %s65, %s66
      %p70 = pneg %p64
      %p71 = scmp.eq.s32.totalorder %s13, 1
      %p72 = por %p70, %p71
      %p73 = scmp.ne.s32.totalorder %s65, %s68
      %p74 = scmp.eq.s32.totalorder %s13, 0
      %p75 = por %p73, %p74
      %p76 = scmp.ne.s32.totalorder %s65, %s68
      %p77 = scmp.eq.s32.totalorder %s18, 1
      %p78 = por %p76, %p77
      %p79 = scmp.ne.s32.totalorder %s68, %s69
      %p80 = scmp.eq.s32.totalorder %s18, 0
      %p81 = por %p79, %p80
      %p82 = scmp.ne.s32.totalorder %s68, %s69
      %p83 = scmp.eq.s32.totalorder %s19, 1
      %p84 = por %p82, %p83
      %p86 = scmp.ne.s32.totalorder %s69, %s85
      %p87 = scmp.eq.s32.totalorder %s19, 0
      %p88 = por %p86, %p87
      %p89 = scmp.le.s32.totalorder 1, %s13
      %p90 = scmp.lt.s32.totalorder %s13, 3
      %p91 = pnand %p89, %p90
      %p92 = pneg %p91
      // Predicated region
      $region9: #{tpu_custom_call.1} parent=5 // pred_check
        _
      $region10: #{tpu_custom_call.1} parent=5 // pred_check_branch
        %94 = sbr.rel (%p91) target = $region12
      $region11: #{tpu_custom_call.1} parent=5 // pred_region
        %s95 = ssub.s32 %s13, 1
      $region12: #{tpu_custom_call.1} parent=5 // pred_fallthru
        _
      %p96 = scmp.lt.s32.totalorder %s13, 2
      // Predicated region
      $region13: #{tpu_custom_call.1} parent=5 // pred_check
        %p97 = pneg %p96
      $region14: #{tpu_custom_call.1} parent=5 // pred_check_branch
        %99 = sbr.rel (%p97) target = $region16
      $region15: #{tpu_custom_call.1} parent=5 // pred_region
        // Predicated region
        $region17: #{tpu_custom_call.1} parent=15 // pred_check
          %p100 = pneg %p47
        $region18: #{tpu_custom_call.1} parent=15 // pred_check_branch
          %102 = sbr.rel (%p100) target = $region20
        $region19: #{tpu_custom_call.1} parent=15 // pred_region
          %s103 = sand.u32 %s37, 1
          %s104 = scalar_lea.sflag [#allocation3], %s103
          %s105 = sand.u32 %s37, 1
          %s106 = smul.addr %s105, 64
          %s107 = scalar_lea.vmem [#allocation2], %s106
          %s108 = smul.u32 4, %s21
          %s110 = ssub.s32 1024, 1024
          %111 = vsyncadd %s104, %s110
          %s112 = smul.addr %s108, 2
          %s113 = smul.addr %s20, 8
          %s114 = sadd.s32 %s112, %s113
          %s115 = smul.addr %s114, 128
          %s116 = scalar_lea.hbm %s0, %s115
          %s117 = sshll.u32 %s107, 4
          %s118 = int_to_ptr.vmem [resolvable:$true] %s117
          %123 = dma.hbm_to_vmem [thread:$0]  %s116, 1024, %s118, %s104, 128, 128, 8
        $region20: #{tpu_custom_call.1} parent=15 // pred_fallthru
          _
      $region16: #{tpu_custom_call.1} parent=5 // pred_fallthru
        _
      %p124 = scmp.le.s32.totalorder 1, %s13
      %p125 = scmp.lt.s32.totalorder %s13, 3
      %p126 = pnand %p124, %p125
      %p127 = pneg %p126
      // Predicated region
      $region21: #{tpu_custom_call.1} parent=5 // pred_check
        _
      $region22: #{tpu_custom_call.1} parent=5 // pred_check_branch
        %129 = sbr.rel (%p126) target = $region24
      $region23: #{tpu_custom_call.1} parent=5 // pred_region
        %s130 = ssub.s32 %s13, 1
        %s131 = sand.u32 %s40, 1
        %s132 = scalar_lea.sflag [#allocation3], %s131
        %s133 = sand.u32 %s40, 1
        %s134 = smul.addr %s133, 64
        %s135 = scalar_lea.vmem [#allocation2], %s134
        // Predicated region
        $region25: #{tpu_custom_call.1} parent=23 // pred_check
          %p136 = pneg %p53
        $region26: #{tpu_custom_call.1} parent=23 // pred_check_branch
          %138 = sbr.rel (%p136) target = $region28
        $region27: #{tpu_custom_call.1} parent=23 // pred_region
          %139 = dma.done %s132, 1024
        $region28: #{tpu_custom_call.1} parent=23 // pred_fallthru
          _
        %s140 = sand.u32 %s40, 1
        %s141 = scalar_lea.sflag [#allocation3], %s140
        %s142 = sand.u32 %s40, 1
        %s143 = smul.addr %s142, 64
        %s144 = scalar_lea.vmem [#allocation2], %s143
        %p145 = pneg %p53
        %p146 = pneg %p50
        %p147 = pneg %p81
        %p148 = pneg %p78
        %s149 = sand.u32 %s68, 1
        %s150 = scalar_lea.sflag [#allocation4], %s149
        %s151 = sand.u32 %s68, 1
        %s152 = smul.addr %s151, 64
        %s153 = scalar_lea.vmem [#allocation5], %s152
        %s154 = smul.u32 4, %s23
        %s155 = smul.u32 4, %s23
        %v156 = vld [vmem:[%s135] sm:$0xff]
        %v157 = vld [vmem:[%s135 + $0x8] sm:$0xff]
        %v158 = vld [vmem:[%s135 + $0x10] sm:$0xff]
        %v159 = vld [vmem:[%s135 + $0x18] sm:$0xff]
        %v160 = vld [vmem:[%s135 + $0x20] sm:$0xff]
        %v161 = vld [vmem:[%s135 + $0x28] sm:$0xff]
        %v162 = vld [vmem:[%s135 + $0x30] sm:$0xff]
        %v163 = vld [vmem:[%s135 + $0x38] sm:$0xff]
        %v164 = vmul.f32 %v156, 1.442695
        %v165 = vpow.pop %v164
        %v166 = vmul.f32 %v157, 1.442695
        %v167 = vpow.pop %v166
        %v168 = vmul.f32 %v158, 1.442695
        %v169 = vpow.pop %v168
        %v170 = vmul.f32 %v159, 1.442695
        %v171 = vpow.pop %v170
        %v172 = vmul.f32 %v160, 1.442695
        %v173 = vpow.pop %v172
        %v174 = vmul.f32 %v161, 1.442695
        %v175 = vpow.pop %v174
        %v176 = vmul.f32 %v162, 1.442695
        %v177 = vpow.pop %v176
        %v178 = vmul.f32 %v163, 1.442695
        %v179 = vpow.pop %v178
        %vm180 = vcmask 130048
        %v181 = vsel %vm180, %v165, 0.0
        %v182 = vsel %vm180, %v167, 0.0
        %v183 = vadd.f32 %v181, %v182
        %v184 = vrot.slane %v183, 4
        %v185 = vadd.f32 %v183, %v184
        %v186 = vrot.slane %v185, 2
        %v187 = vadd.f32 %v185, %v186
        %v188 = vrot.slane %v187, 1
        %v189 = vadd.f32 %v187, %v188
        %v190 = vsel %vm180, %v169, 0.0
        %v191 = vsel %vm180, %v171, 0.0
        %v192 = vadd.f32 %v190, %v191
        %v193 = vrot.slane %v192, 4
        %v194 = vadd.f32 %v192, %v193
        %v195 = vrot.slane %v194, 2
        %v196 = vadd.f32 %v194, %v195
        %v197 = vrot.slane %v196, 1
        %v198 = vadd.f32 %v196, %v197
        %v199 = vsel %vm180, %v173, 0.0
        %v200 = vsel %vm180, %v175, 0.0
        %v201 = vadd.f32 %v199, %v200
        %v202 = vrot.slane %v201, 4
        %v203 = vadd.f32 %v201, %v202
        %v204 = vrot.slane %v203, 2
        %v205 = vadd.f32 %v203, %v204
        %v206 = vrot.slane %v205, 1
        %v207 = vadd.f32 %v205, %v206
        %v208 = vsel %vm180, %v177, 0.0
        %v209 = vsel %vm180, %v179, 0.0
        %v210 = vadd.f32 %v208, %v209
        %v211 = vrot.slane %v210, 4
        %v212 = vadd.f32 %v210, %v211
        %v213 = vrot.slane %v212, 2
        %v214 = vadd.f32 %v212, %v213
        %v215 = vrot.slane %v214, 1
        %v216 = vadd.f32 %v214, %v215
        %v217 = vrcp.pop %v189
        %v218 = vrcp.pop %v198
        %v219 = vrcp.pop %v207
        %v220 = vrcp.pop %v216
        %v221 = vmul.f32 %v165, %v217
        %v222 = vmul.f32 %v167, %v217
        %v223 = vmul.f32 %v169, %v218
        %v224 = vmul.f32 %v171, %v218
        %v225 = vmul.f32 %v173, %v219
        %v226 = vmul.f32 %v175, %v219
        %v227 = vmul.f32 %v177, %v220
        %v228 = vmul.f32 %v179, %v220
        %229 = vst.msk [vmem:[%s153] sm:$0xff] %vm180, %v221
        %230 = vst.msk [vmem:[%s153 + $0x8] sm:$0xff] %vm180, %v222
        %231 = vst.msk [vmem:[%s153 + $0x10] sm:$0xff] %vm180, %v223
        %232 = vst.msk [vmem:[%s153 + $0x18] sm:$0xff] %vm180, %v224
        %233 = vst.msk [vmem:[%s153 + $0x20] sm:$0xff] %vm180, %v225
        %234 = vst.msk [vmem:[%s153 + $0x28] sm:$0xff] %vm180, %v226
        %235 = vst.msk [vmem:[%s153 + $0x30] sm:$0xff] %vm180, %v227
        %236 = vst.msk [vmem:[%s153 + $0x38] sm:$0xff] %vm180, %v228
        %s237 = sand.u32 %s68, 1
        %s238 = scalar_lea.sflag [#allocation4], %s237
        %s239 = sand.u32 %s68, 1
        %s240 = smul.addr %s239, 64
        %s241 = scalar_lea.vmem [#allocation5], %s240
        // Predicated region
        $region29: #{tpu_custom_call.1} parent=23 // pred_check
          %p242 = pneg %p78
        $region30: #{tpu_custom_call.1} parent=23 // pred_check_branch
          %244 = sbr.rel (%p242) target = $region32
        $region31: #{tpu_custom_call.1} parent=23 // pred_region
          %s245 = smul.u32 4, %s23
          %s247 = ssub.s32 1024, 1024
          %248 = vsyncadd %s238, %s247
          %s249 = smul.addr %s245, 2
          %s250 = smul.addr %s22, 8
          %s251 = sadd.s32 %s249, %s250
          %s252 = smul.addr %s251, 128
          %s253 = scalar_lea.hbm %s1, %s252
          %s254 = sshll.u32 %s241, 4
          %s255 = int_to_ptr.vmem [resolvable:$true] %s254
          %260 = dma.vmem_to_hbm [thread:$0]  %s255, 1024, %s253, %s238, 128, 128, 8
        $region32: #{tpu_custom_call.1} parent=23 // pred_fallthru
          _
      $region24: #{tpu_custom_call.1} parent=5 // pred_fallthru
        _
      %p261 = scmp.le.s32.totalorder 2, %s13
      // Predicated region
      $region33: #{tpu_custom_call.1} parent=5 // pred_check
        %p262 = pneg %p261
      $region34: #{tpu_custom_call.1} parent=5 // pred_check_branch
        %264 = sbr.rel (%p262) target = $region36
      $region35: #{tpu_custom_call.1} parent=5 // pred_region
        %s265 = ssub.s32 %s13, 2
        // Predicated region
        $region37: #{tpu_custom_call.1} parent=35 // pred_check
          %p266 = pneg %p84
        $region38: #{tpu_custom_call.1} parent=35 // pred_check_branch
          %268 = sbr.rel (%p266) target = $region40
        $region39: #{tpu_custom_call.1} parent=35 // pred_region
          %s269 = sand.u32 %s69, 1
          %s270 = scalar_lea.sflag [#allocation4], %s269
          %s271 = sand.u32 %s69, 1
          %s272 = smul.addr %s271, 64
          %s273 = scalar_lea.vmem [#allocation5], %s272
          %274 = dma.done %s270, 1024
        $region40: #{tpu_custom_call.1} parent=35 // pred_fallthru
          _
      $region36: #{tpu_custom_call.1} parent=5 // pred_fallthru
        _
    $region6: #{tpu_custom_call.1} parent=1 // loop_footer
      %s17 = sadd.s32 1, %s13
    $region7: #{tpu_custom_call.1} parent=1 // loop_footer_branch
      %12 = sbr.rel target = $region3
    $region8: #{tpu_custom_call.1} parent=1 // loop_exit
      _
    %275 = vsyncpa [#allocation3], 1
    %s276 = scalar_lea.sflag [#allocation3], 1
    %277 = vsyncpa %s276, 1
    %278 = vsyncpa [#allocation4], 1
    %s279 = scalar_lea.sflag [#allocation4], 1
    %280 = vsyncpa %s279, 1

</llo_original>
